<compile_context>
chip_gen: v7x
topology: tpu7x:2x2x1
jax: 0.10.0
libtpu: 0.0.40
codegen_flags: <defaults>
</compile_context>

<pallas_src>
import functools

import jax
import jax.numpy as jnp
from jax import lax
from jax.experimental import pallas as pl
from jax.experimental.pallas import tpu as pltpu


# ----------------------------------------------------------------------------
# Kernel 1: fused Q/K/V projection.
#   acc = x_tile @ [Wq^T | Wk^T | Wv^T] + [bq | bk | bv]      (f32 accumulate)
#   q   = acc[:, :H] * (1/sqrt(D))   -> bf16                  (scale folded here)
#   k   = acc[:, H:2H]               -> bf16
#   v   = acc[:, 2H:]                -> bf16
# ----------------------------------------------------------------------------
def _qkv_proj_kernel(x_ref, w_ref, b_ref, q_ref, k_ref, v_ref, *, scale):
    x = x_ref[...].astype(jnp.bfloat16)            # cast in-kernel (no extra pass)
    acc = jnp.dot(x, w_ref[...], preferred_element_type=jnp.float32) + b_ref[...]
    h = q_ref.shape[-1]
    q_ref[...] = (acc[:, :h] * scale).astype(q_ref.dtype)
    k_ref[...] = acc[:, h:2 * h].astype(k_ref.dtype)
    v_ref[...] = acc[:, 2 * h:].astype(v_ref.dtype)


# ----------------------------------------------------------------------------
# Kernel 2: attention for one (batch, head-group) tile.
#   For each head h in the group (q already scaled by 1/sqrt(D)):
#     scores = q_h @ k_h^T            (f32 accumulate, no explicit transpose)
#     probs  = softmax(scores) [* head_mask[h]]
#     ctx_h  = probs @ v_h
#   The G per-head contexts are concatenated into one lane-dense (S, G*D)
#   bf16 store.  Mask input (SMEM scalars) and probs output are optional.
# ----------------------------------------------------------------------------
def _attention_kernel(*refs, head_group, head_dim, has_mask, out_probs):
    q_ref, k_ref, v_ref = refs[0], refs[1], refs[2]
    idx = 3
    mask_ref = refs[idx] if has_mask else None
    idx += int(has_mask)
    ctx_ref = refs[idx]
    probs_ref = refs[idx + 1] if out_probs else None

    g = pl.program_id(1)
    d = head_dim
    ctx_parts = []
    for h in range(head_group):                       # static unroll over heads
        q = q_ref[:, h * d:(h + 1) * d]               # (S, D) bf16, pre-scaled
        k = k_ref[:, h * d:(h + 1) * d]               # (S, D) bf16
        v = v_ref[:, h * d:(h + 1) * d]               # (S, D) bf16

        # scores[i, j] = sum_d q[i, d] * k[j, d]   (contract on last dims)
        s = lax.dot_general(q, k, (((1,), (1,)), ((), ())),
                            preferred_element_type=jnp.float32)

        # numerically-stable softmax over keys (f32); reciprocal on the EUP.
        s = s - jnp.max(s, axis=-1, keepdims=True)
        e = jnp.exp(s)
        p = e * pl.reciprocal(jnp.sum(e, axis=-1, keepdims=True), approx=True)

        if has_mask:
            p = p * mask_ref[0, g * head_group + h]   # scalar SMEM read
        if out_probs:
            probs_ref[h, :, :] = p

        ctx_parts.append(
            jnp.dot(p.astype(v.dtype), v, preferred_element_type=jnp.float32))

    ctx = jnp.concatenate(ctx_parts, axis=-1)         # (S, G*D) lane-dense
    ctx_ref[...] = ctx.astype(ctx_ref.dtype)


# ----------------------------------------------------------------------------
# One-time weight preparation (layout work paid once, not per forward call).
# ----------------------------------------------------------------------------
def prepare_params(params):
    if "w_qkv" in params:
        return params
    nh = int(params["num_attention_heads"])
    # nn.Linear computes x @ W^T + b; concatenate the three transposed weights.
    w_qkv = jnp.concatenate(
        [params["query_weight"].T, params["key_weight"].T,
         params["value_weight"].T], axis=1).astype(jnp.bfloat16)        # (H, 3H)
    b_qkv = jnp.concatenate(
        [params["query_bias"], params["key_bias"], params["value_bias"]],
        axis=0).reshape(1, -1).astype(jnp.float32)                      # (1, 3H)
    return {"num_attention_heads": nh, "w_qkv": w_qkv, "b_qkv": b_qkv}


def _choose_head_group(num_heads, head_dim):
    """Smallest head group whose lane width G*D is a dense multiple of 128
    (preferring >= 256 lanes); falls back to all heads for tiny dims so the
    block equals the full array dim."""
    for g in range(1, num_heads + 1):
        if num_heads % g == 0 and (g * head_dim) % 128 == 0 and g * head_dim >= 256:
            return g
    for g in range(1, num_heads + 1):
        if num_heads % g == 0 and (g * head_dim) % 128 == 0:
            return g
    return num_heads


# ----------------------------------------------------------------------------
# Python wrapper mirroring TtDeiTSelfAttention.forward
# ----------------------------------------------------------------------------
def tt_deit_self_attention(hidden_states, params, head_mask=None,
                           output_attentions=False):
    params = prepare_params(params)
    num_heads = int(params["num_attention_heads"])
    assert hidden_states.ndim == 4 and hidden_states.shape[0] == 1
    _, B, S, H = hidden_states.shape
    assert H % num_heads == 0
    D = H // num_heads
    rows = B * S
    scale = 1.0 / float(D) ** 0.5

    # ---------------- Stage 1: fused, row-tiled QKV projection ----------------
    x = hidden_states.reshape(rows, H)                       # free reshape, f32
    w_qkv, b_qkv = params["w_qkv"], params["b_qkv"]

    TM = min(rows, 512)
    grid_m = pl.cdiv(rows, TM)
    qkv_spec_out = pl.BlockSpec((TM, H), lambda i: (i, 0))
    q2d, k2d, v2d = pl.pallas_call(
        functools.partial(_qkv_proj_kernel, scale=scale),
        grid=(grid_m,),
        in_specs=[
            pl.BlockSpec((TM, H), lambda i: (i, 0)),          # x row tile (f32)
            pl.BlockSpec((H, 3 * H), lambda i: (0, 0)),       # resident weight
            pl.BlockSpec((1, 3 * H), lambda i: (0, 0)),       # resident bias
        ],
        out_specs=[qkv_spec_out, qkv_spec_out, qkv_spec_out],
        out_shape=[jax.ShapeDtypeStruct((rows, H), jnp.bfloat16)] * 3,
        compiler_params=pltpu.CompilerParams(
            dimension_semantics=("parallel",),
            vmem_limit_bytes=64 * 1024 * 1024),
    )(x, w_qkv, b_qkv)

    # ---------------- Stage 2: attention over (batch, head-group) grid ----------------
    G = _choose_head_group(num_heads, D)
    GD = G * D
    n_groups = num_heads // G
    has_mask = head_mask is not None

    tile_spec = pl.BlockSpec((S, GD), lambda b, g: (b, g))   # q/k/v/ctx tiles
    in_specs = [tile_spec, tile_spec, tile_spec]
    in_args = [q2d, k2d, v2d]
    if has_mask:
        hm = jnp.asarray(head_mask, jnp.float32)
        if hm.size != num_heads:
            # TODO(synk): arbitrary (B,NH,S,S) elementwise head_mask would need a
            # dense blocked mask input; only per-head masks are supported here.
            raise NotImplementedError("only per-head head_mask is supported")
        in_specs.append(pl.BlockSpec(memory_space=pltpu.MemorySpace.SMEM))
        in_args.append(hm.reshape(1, num_heads))             # tiny SMEM resident

    out_specs = [tile_spec]
    out_shape = [jax.ShapeDtypeStruct((rows, H), jnp.bfloat16)]
    if output_attentions:
        out_specs.append(
            pl.BlockSpec((None, G, S, S), lambda b, g: (b, g, 0, 0)))
        out_shape.append(
            jax.ShapeDtypeStruct((B, num_heads, S, S), jnp.float32))

    kernel = functools.partial(_attention_kernel, head_group=G, head_dim=D,
                               has_mask=has_mask, out_probs=output_attentions)
    outs = pl.pallas_call(
        kernel,
        grid=(B, n_groups),
        in_specs=in_specs,
        out_specs=out_specs,
        out_shape=out_shape,
        compiler_params=pltpu.CompilerParams(
            dimension_semantics=("parallel", "parallel"),
            vmem_limit_bytes=64 * 1024 * 1024),
    )(*in_args)
    if not isinstance(outs, (list, tuple)):
        outs = (outs,)

    # (B*S, H) -> (1, B, S, H): pure metadata reshape, no transpose.
    context_layer = outs[0].reshape(1, B, S, H)

    if output_attentions:
        return (context_layer, outs[1])
    return (context_layer,)


# ----------------------------------------------------------------------------
# Pure-JAX reference (correctness check only).
# ----------------------------------------------------------------------------
def _reference(hidden_states, params, head_mask=None):
    num_heads = int(params["num_attention_heads"])
    _, B, S, H = hidden_states.shape
    D = H // num_heads
    x = hidden_states.reshape(B * S, H).astype(jnp.float32)
    q = x @ params["query_weight"].T + params["query_bias"]
    k = x @ params["key_weight"].T + params["key_bias"]
    v = x @ params["value_weight"].T + params["value_bias"]
    sh = lambda t: t.reshape(B, S, num_heads, D).transpose(0, 2, 1, 3)
    qh, kh, vh = sh(q), sh(k), sh(v)
    scores = jnp.einsum("bhqd,bhkd->bhqk", qh, kh) / jnp.sqrt(jnp.float32(D))
    probs = jax.nn.softmax(scores, axis=-1)
    if head_mask is not None:
        probs = probs * head_mask
    ctx = jnp.einsum("bhqk,bhkd->bhqd", probs, vh)
    return ctx.transpose(0, 2, 1, 3).reshape(1, B, S, H)


if __name__ == "__main__":
    # Small synthetic config consistent with the module: hidden=32, heads=4.
    B, S, H, NH = 2, 8, 32, 4

    key = jax.random.PRNGKey(0)
    ks = jax.random.split(key, 7)
    raw_params = {
        "num_attention_heads": NH,
        "query_weight": jax.random.normal(ks[0], (H, H), jnp.float32) * 0.05,
        "query_bias": jax.random.normal(ks[1], (H,), jnp.float32) * 0.05,
        "key_weight": jax.random.normal(ks[2], (H, H), jnp.float32) * 0.05,
        "key_bias": jax.random.normal(ks[3], (H,), jnp.float32) * 0.05,
        "value_weight": jax.random.normal(ks[4], (H, H), jnp.float32) * 0.05,
        "value_bias": jax.random.normal(ks[5], (H,), jnp.float32) * 0.05,
    }
    hidden_states = jax.random.normal(ks[6], (1, B, S, H), jnp.float32)

    # One-time weight preparation (transpose + concat + bf16 cast).
    params = prepare_params(raw_params)

    # Case 1: no head mask, with attention probs output.
    context_layer, attention_probs = tt_deit_self_attention(
        hidden_states, params, head_mask=None, output_attentions=True)
    jax.block_until_ready(context_layer)
    jax.block_until_ready(attention_probs)

    ref = _reference(hidden_states, raw_params)
    assert context_layer.shape == (1, B, S, H)
    assert attention_probs.shape == (B, NH, S, S)
    assert jnp.allclose(context_layer.astype(jnp.float32), ref,
                        atol=2e-2, rtol=2e-2)
    assert jnp.allclose(jnp.sum(attention_probs, axis=-1), 1.0, atol=1e-2)

    # Case 2: head mask supplied, no attention probs output.
    head_mask = jnp.array([1.0, 0.0, 1.0, 1.0], jnp.float32)
    (context_layer2,) = tt_deit_self_attention(
        hidden_states, params, head_mask=head_mask, output_attentions=False)
    jax.block_until_ready(context_layer2)
    ref2 = _reference(hidden_states, raw_params,
                      head_mask=head_mask.reshape(1, NH, 1, 1))
    assert context_layer2.shape == (1, B, S, H)
    assert jnp.allclose(context_layer2.astype(jnp.float32), ref2,
                        atol=2e-2, rtol=2e-2)

    print("KERNEL_OK")
</pallas_src>

<mosaic_0001>
module attributes {stable_mosaic.version = 11 : i64} {
  func.func @_qkv_proj_kernel(%arg0: i32, %arg1: memref<16x32xf32, #tpu.memory_space<vmem>>, %arg2: memref<32x96xbf16, #tpu.memory_space<vmem>>, %arg3: memref<1x96xf32, #tpu.memory_space<vmem>>, %arg4: memref<16x32xbf16, #tpu.memory_space<vmem>>, %arg5: memref<16x32xbf16, #tpu.memory_space<vmem>>, %arg6: memref<16x32xbf16, #tpu.memory_space<vmem>>) attributes {dimension_semantics = [#tpu.dimension_semantics<parallel>], iteration_bounds = array<i64: 1>, scalar_prefetch = 0 : i64, scratch_operands = 0 : i64, tpu.core_type = #tpu.core_type<tc>, window_params = [{transform_indices = @transform_0, window_bounds = array<i64: 16, 32>}, {pipeline_mode = #tpu.pipeline_mode<synchronous>, transform_indices = @transform_1, window_bounds = array<i64: 32, 96>}, {pipeline_mode = #tpu.pipeline_mode<synchronous>, transform_indices = @transform_2, window_bounds = array<i64: 1, 96>}, {transform_indices = @transform_3, window_bounds = array<i64: 16, 32>}, {transform_indices = @transform_4, window_bounds = array<i64: 16, 32>}, {transform_indices = @transform_5, window_bounds = array<i64: 16, 32>}]} {
    %c0 = arith.constant 0 : index
    %c0_0 = arith.constant 0 : index
    %0 = vector.load %arg1[%c0, %c0_0] : memref<16x32xf32, #tpu.memory_space<vmem>>, vector<16x32xf32>
    %1 = arith.truncf %0 : vector<16x32xf32> to vector<16x32xbf16>
    %c0_1 = arith.constant 0 : index
    %c0_2 = arith.constant 0 : index
    %2 = vector.load %arg2[%c0_1, %c0_2] : memref<32x96xbf16, #tpu.memory_space<vmem>>, vector<32x96xbf16>
    %cst = arith.constant dense<0.000000e+00> : vector<16x96xf32>
    %3 = tpu.matmul %1, %2, %cst {dimension_numbers = #tpu.dot_dimension_numbers<[1], [0], [0], [1], [0, 0, 1, 1], [], []>} : vector<16x32xbf16>, vector<32x96xbf16>, vector<16x96xf32> -> vector<16x96xf32>
    %c0_3 = arith.constant 0 : index
    %c0_4 = arith.constant 0 : index
    %4 = vector.load %arg3[%c0_3, %c0_4] : memref<1x96xf32, #tpu.memory_space<vmem>>, vector<1x96xf32>
    %5 = vector.broadcast %4 : vector<1x96xf32> to vector<16x96xf32>
    %6 = arith.addf %3, %5 : vector<16x96xf32>
    %7 = vector.extract_strided_slice %6 {offsets = [0, 0], sizes = [16, 32], strides = [1, 1]} : vector<16x96xf32> to vector<16x32xf32>
    %cst_5 = arith.constant 0.353553385 : f32
    %8 = vector.broadcast %cst_5 : f32 to vector<16x32xf32>
    %9 = arith.mulf %7, %8 : vector<16x32xf32>
    %10 = arith.truncf %9 : vector<16x32xf32> to vector<16x32xbf16>
    %c0_6 = arith.constant 0 : index
    %c0_7 = arith.constant 0 : index
    %11 = vector.load %arg4[%c0_6, %c0_7] : memref<16x32xbf16, #tpu.memory_space<vmem>>, vector<16x32xbf16>
    tpu.vector_store %arg4[%c0_6, %c0_7], %10 {strides = array<i32>} : memref<16x32xbf16, #tpu.memory_space<vmem>>, vector<16x32xbf16>,
    %12 = vector.extract_strided_slice %6 {offsets = [0, 32], sizes = [16, 32], strides = [1, 1]} : vector<16x96xf32> to vector<16x32xf32>
    %13 = arith.truncf %12 : vector<16x32xf32> to vector<16x32xbf16>
    %c0_8 = arith.constant 0 : index
    %c0_9 = arith.constant 0 : index
    %14 = vector.load %arg5[%c0_8, %c0_9] : memref<16x32xbf16, #tpu.memory_space<vmem>>, vector<16x32xbf16>
    tpu.vector_store %arg5[%c0_8, %c0_9], %13 {strides = array<i32>} : memref<16x32xbf16, #tpu.memory_space<vmem>>, vector<16x32xbf16>,
    %15 = vector.extract_strided_slice %6 {offsets = [0, 64], sizes = [16, 32], strides = [1, 1]} : vector<16x96xf32> to vector<16x32xf32>
    %16 = arith.truncf %15 : vector<16x32xf32> to vector<16x32xbf16>
    %c0_10 = arith.constant 0 : index
    %c0_11 = arith.constant 0 : index
    %17 = vector.load %arg6[%c0_10, %c0_11] : memref<16x32xbf16, #tpu.memory_space<vmem>>, vector<16x32xbf16>
    tpu.vector_store %arg6[%c0_10, %c0_11], %16 {strides = array<i32>} : memref<16x32xbf16, #tpu.memory_space<vmem>>, vector<16x32xbf16>,
    return
  }
  func.func @transform_0(%arg0: i32) -> (i32, i32) {
    %c0_i32 = arith.constant 0 : i32
    %c0_i32_0 = arith.constant 0 : i32
    return %arg0, %c0_i32 : i32, i32
  }
  func.func @transform_1(%arg0: i32) -> (i32, i32) {
    %c0_i32 = arith.constant 0 : i32
    %c0_i32_0 = arith.constant 0 : i32
    %c0_i32_1 = arith.constant 0 : i32
    return %c0_i32, %c0_i32_0 : i32, i32
  }
  func.func @transform_2(%arg0: i32) -> (i32, i32) {
    %c0_i32 = arith.constant 0 : i32
    %c0_i32_0 = arith.constant 0 : i32
    %c0_i32_1 = arith.constant 0 : i32
    return %c0_i32, %c0_i32_0 : i32, i32
  }
  func.func @transform_3(%arg0: i32) -> (i32, i32) {
    %c0_i32 = arith.constant 0 : i32
    %c0_i32_0 = arith.constant 0 : i32
    return %arg0, %c0_i32 : i32, i32
  }
  func.func @transform_4(%arg0: i32) -> (i32, i32) {
    %c0_i32 = arith.constant 0 : i32
    %c0_i32_0 = arith.constant 0 : i32
    return %arg0, %c0_i32 : i32, i32
  }
  func.func @transform_5(%arg0: i32) -> (i32, i32) {
    %c0_i32 = arith.constant 0 : i32
    %c0_i32_0 = arith.constant 0 : i32
    return %arg0, %c0_i32 : i32, i32
  }
}

</mosaic_0001>

<llo_original>
// kernel: tpu_custom_call.1
$region0: #{tpu_custom_call.1}
  #allocation0 [shape = 'u32[]', space=smem, size = 0x4, offset = 0x4, fixed_abs, tag = 'smem constant byte address 0x4 - core index']
  #allocation1 [shape = 'u32[144,128]{1,0:T(1,128)}', space=vmem, size = 0x12000, scoped, tag = 'internal scratch']
  %s0 = inlined_call_operand.hbm [shape: f32[16,32], index: 0, kind: input, shape index: {}]
  %s1 = inlined_call_operand.hbm [shape: bf16[32,96], index: 1, kind: input, shape index: {}]
  %s2 = inlined_call_operand.hbm [shape: f32[1,96], index: 2, kind: input, shape index: {}]
  %s3 = inlined_call_operand.hbm [shape: bf16[16,32], index: 3, kind: output, shape index: {0}]
  %s4 = inlined_call_operand.hbm [shape: bf16[16,32], index: 4, kind: output, shape index: {1}]
  %s5 = inlined_call_operand.hbm [shape: bf16[16,32], index: 5, kind: output, shape index: {2}]
  %6 = xla_tuple %s3, %s4, %s5
  %s7 = sld [smem:[#allocation0]]
  $region50: #{tpu_custom_call.1} parent=0
    _
  %s9 = ssub.s32 1, %s7
  %s10 = scalar_select 0, %s9, %s7
  $region1: #{tpu_custom_call.1} parent=0
    #allocation2 [shape = 'u8[8192]{0}', space=vmem, size = 0x2000, scoped, tag = 'input window, operand 0, single buffered']
    #allocation3 [shape = 's32[1]{0}', space=sflag, size = 0x4, scoped, tag = 'scoped memory for tpu_custom_call.1']
    #allocation4 [shape = 's32[1]{0}', space=sflag, size = 0x4, scoped, tag = 'scoped memory for tpu_custom_call.1']
    #allocation5 [shape = 'u8[8192]{0}', space=vmem, size = 0x2000, scoped, tag = 'input window, operand 1, single buffered']
    #allocation6 [shape = 's32[1]{0}', space=sflag, size = 0x4, scoped, tag = 'scoped memory for tpu_custom_call.1']
    #allocation7 [shape = 'u8[512]{0}', space=vmem, size = 0x400, scoped, tag = 'input window, operand 2, single buffered']
    #allocation8 [shape = 'u8[4096]{0}', space=vmem, size = 0x1000, scoped, tag = 'output window, operand 0, single buffered']
    #allocation9 [shape = 'u8[4096]{0}', space=vmem, size = 0x1000, scoped, tag = 'output window, operand 1, single buffered']
    #allocation10 [shape = 's32[1]{0}', space=sflag, size = 0x4, scoped, tag = 'scoped memory for tpu_custom_call.1']
    #allocation11 [shape = 'u8[4096]{0}', space=vmem, size = 0x1000, scoped, tag = 'output window, operand 2, single buffered']
    %11 = vsyncpa [#allocation3], 0
    %12 = vsyncpa [#allocation6], 0
    %13 = vsyncpa [#allocation4], 0
    %14 = vsyncpa [#allocation10], 0
    // Predicated region
    $region2: #{tpu_custom_call.1} parent=1 // pred_check
      _
    $region3: #{tpu_custom_call.1} parent=1 // pred_check_branch
      %16 = sbr.rel (0) target = $region5
    $region4: #{tpu_custom_call.1} parent=1 // pred_region
      %s18 = ssub.s32 256, 256
      %19 = vsyncadd [#allocation3], %s18
      %s20 = sshll.u32 [#allocation2], 4
      %s21 = int_to_ptr.vmem [resolvable:$true] %s20
      %26 = dma.hbm_to_vmem [thread:$0]  %s0, 256, %s21, [#allocation3], 128, 128, 8
    $region5: #{tpu_custom_call.1} parent=1 // pred_fallthru
      _
    // Predicated region
    $region6: #{tpu_custom_call.1} parent=1 // pred_check
      _
    $region7: #{tpu_custom_call.1} parent=1 // pred_check_branch
      %28 = sbr.rel (0) target = $region9
    $region8: #{tpu_custom_call.1} parent=1 // pred_region
      %s30 = ssub.s32 256, 256
      %31 = vsyncadd [#allocation6], %s30
      %s32 = sshll.u32 [#allocation5], 4
      %s33 = int_to_ptr.vmem [resolvable:$true] %s32
      %38 = dma.hbm_to_vmem [thread:$0]  %s1, 256, %s33, [#allocation6], 64, 64, 4
    $region9: #{tpu_custom_call.1} parent=1 // pred_fallthru
      _
    // Predicated region
    $region10: #{tpu_custom_call.1} parent=1 // pred_check
      _
    $region11: #{tpu_custom_call.1} parent=1 // pred_check_branch
      %40 = sbr.rel (0) target = $region13
    $region12: #{tpu_custom_call.1} parent=1 // pred_region
      %s42 = ssub.s32 16, 16
      %43 = vsyncadd [#allocation6], %s42
      %s45 = sshll.u32 [#allocation7], 4
      %s46 = int_to_ptr.vmem [resolvable:$true] %s45
      %48 = dma.hbm_to_vmem [thread:$0]  %s2, 16, %s46, [#allocation6]
    $region13: #{tpu_custom_call.1} parent=1 // pred_fallthru
      _
    // Predicated region
    $region14: #{tpu_custom_call.1} parent=1 // pred_check
      _
    $region15: #{tpu_custom_call.1} parent=1 // pred_check_branch
      %50 = sbr.rel (0) target = $region17
    $region16: #{tpu_custom_call.1} parent=1 // pred_region
      %51 = dma.done [#allocation3], 256
    $region17: #{tpu_custom_call.1} parent=1 // pred_fallthru
      _
    // Predicated region
    $region18: #{tpu_custom_call.1} parent=1 // pred_check
      _
    $region19: #{tpu_custom_call.1} parent=1 // pred_check_branch
      %53 = sbr.rel (0) target = $region21
    $region20: #{tpu_custom_call.1} parent=1 // pred_region
      %54 = dma.done [#allocation6], 256
    $region21: #{tpu_custom_call.1} parent=1 // pred_fallthru
      _
    // Predicated region
    $region22: #{tpu_custom_call.1} parent=1 // pred_check
      _
    $region23: #{tpu_custom_call.1} parent=1 // pred_check_branch
      %56 = sbr.rel (0) target = $region25
    $region24: #{tpu_custom_call.1} parent=1 // pred_region
      %57 = dma.done [#allocation6], 16
    $region25: #{tpu_custom_call.1} parent=1 // pred_fallthru
      _
    %v59 = vld [vmem:[#allocation2] sm:$0xff]
    %v60 = vld [vmem:[#allocation2 + $0x8] sm:$0xff]
    %v61 = vpack.c.bf16 %v60, %v59
    %v62 = vld [vmem:[#allocation5] sm:$0xf]
    %v63 = vld [vmem:[#allocation5 + $0x4] sm:$0xf]
    %v64 = vld [vmem:[#allocation5 + $0x8] sm:$0xf]
    %v65 = vld [vmem:[#allocation5 + $0xc] sm:$0xf]
    %v66 = vld [vmem:[#allocation7] sm:$0x1]
    %v68 = vlaneseq
    %v69 = vshrl.u32 %v68, 7
    %v70 = vsub.s32 0, %v69
    %v71 = vrot.slane %v66, %v70
    %v77 = vunpack.c.l.b16 %v62
    %v78 = vunpack.c.l.b16 %v63
    %v79 = vunpack.c.l.b16 %v64
    %v80 = vunpack.c.l.b16 %v65
    %v81 = vpack.c.b16 %v78, %v77
    %v82 = vpack.c.b16 %v80, %v79
    %vm85 = vcmask 261120
    %v87 = vsel %vm85, %v61, 0
    %89 = vmatprep.subr.bf16.mxu0 0
    %90 = vmatpush1.bf16.msra.mxu0 %v81
    %91 = vmatprep.subr.bf16.mxu0 0
    %92 = vmatpush1.bf16.msra.mxu0 %v82
    %93 = vmatprep.subr.bf16.mxu0 0
    %94 = vmatpush1.bf16.msra.mxu0 0
    %95 = vmatprep.subr.bf16.mxu0 0
    %96 = vmatpush1.bf16.msra.mxu0 0
    %97 = vmatprep.subr.bf16.mxu0 0
    %98 = vmatpush1.bf16.msra.mxu0 0
    %99 = vmatprep.subr.bf16.mxu0 0
    %100 = vmatpush1.bf16.msra.mxu0 0
    %101 = vmatprep.subr.bf16.mxu0 0
    %102 = vmatpush1.bf16.msra.mxu0 0
    %103 = vmatprep.subr.bf16.mxu0 0
    %104 = vmatpush1.bf16.msra.mxu0 0
    %105 = vmatprep.subr.bf16.mxu0 0
    %106 = vmatpush1.bf16.msra.mxu0 0
    %107 = vmatprep.subr.bf16.mxu0 0
    %108 = vmatpush1.bf16.msra.mxu0 0
    %109 = vmatprep.subr.bf16.mxu0 0
    %110 = vmatpush1.bf16.msra.mxu0 0
    %111 = vmatprep.subr.bf16.mxu0 0
    %112 = vmatpush1.bf16.msra.mxu0 0
    %113 = vmatprep.subr.bf16.mxu0 0
    %114 = vmatpush1.bf16.msra.mxu0 0
    %115 = vmatprep.subr.bf16.mxu0 0
    %116 = vmatpush1.bf16.msra.mxu0 0
    %117 = vmatprep.subr.bf16.mxu0 0
    %118 = vmatpush1.bf16.msra.mxu0 0
    %119 = vmatprep.subr.bf16.mxu0 0
    %120 = vmatpush1.bf16.msra.mxu0 0
    %121 = vmatprep.mubr.bf16.mxu0 0
    %122 = vmatmul.mubr.bf16.gmra.mrb[0].mxu0 %v87
    %v123 = vpop.f32.mrb[0].mxu0
    %v124 = vadd.f32 %v71, %v123
    %v125 = vpop.f32.mrb[0].mxu0
    %v126 = vpop.f32.mrb[0].mxu0
    %v127 = vadd.f32 %v71, %v126
    %v128 = vpop.f32.mrb[0].mxu0
    %129 = vdwg.mxu0
    %v130 = vmul.f32 %v124, 0.35355338
    %v131 = vmul.f32 %v127, 0.35355338
    %v132 = vpack.c.bf16 %v131, %v130
    %v134 = vunpack.c.l.b16 %v132
    %v135 = vunpack.c.h.b16 %v132
    %v136 = vpack.c.b16 %v134, %v134
    %v137 = vpack.c.b16 %v135, %v135
    %vm140 = vcmask 257024
    %141 = vst.msk [vmem:[#allocation8] sm:$0xf] %vm140, %v136
    %142 = vst.msk [vmem:[#allocation8 + $0x4] sm:$0xf] %vm140, %v137
    %v143 = vpack.c.bf16 %v127, %v124
    %v145 = vunpack.c.l.b16 %v143
    %v146 = vunpack.c.h.b16 %v143
    %v147 = vpack.c.b16 %v145, %v145
    %v148 = vpack.c.b16 %v146, %v146
    %149 = vrot.lane.b32.xlu0 %v147, 96
    %v150 = vpop.permute.xlu0 %149
    %151 = vrot.lane.b32.xlu0 %v148, 96
    %v152 = vpop.permute.xlu0 %151
    %155 = vst.msk [vmem:[#allocation9] sm:$0xf] %vm140, %v150
    %156 = vst.msk [vmem:[#allocation9 + $0x4] sm:$0xf] %vm140, %v152
    %157 = vrot.lane.b32.xlu0 %v147, 64
    %v158 = vpop.permute.xlu0 %157
    %159 = vrot.lane.b32.xlu0 %v148, 64
    %v160 = vpop.permute.xlu0 %159
    %163 = vst.msk [vmem:[#allocation11] sm:$0xf] %vm140, %v158
    %164 = vst.msk [vmem:[#allocation11 + $0x4] sm:$0xf] %vm140, %v160
    // Predicated region
    $region26: #{tpu_custom_call.1} parent=1 // pred_check
      _
    $region27: #{tpu_custom_call.1} parent=1 // pred_check_branch
      %166 = sbr.rel (0) target = $region29
    $region28: #{tpu_custom_call.1} parent=1 // pred_region
      %s168 = ssub.s32 128, 128
      %169 = vsyncadd [#allocation4], %s168
      %s170 = sshll.u32 [#allocation8], 4
      %s171 = int_to_ptr.vmem [resolvable:$true] %s170
      %176 = dma.vmem_to_hbm [thread:$0]  %s171, 128, %s3, [#allocation4], 64, 64, 4
    $region29: #{tpu_custom_call.1} parent=1 // pred_fallthru
      _
    // Predicated region
    $region30: #{tpu_custom_call.1} parent=1 // pred_check
      _
    $region31: #{tpu_custom_call.1} parent=1 // pred_check_branch
      %178 = sbr.rel (0) target = $region33
    $region32: #{tpu_custom_call.1} parent=1 // pred_region
      %s180 = ssub.s32 128, 128
      %181 = vsyncadd [#allocation10], %s180
      %s182 = sshll.u32 [#allocation9], 4
      %s183 = int_to_ptr.vmem [resolvable:$true] %s182
      %188 = dma.vmem_to_hbm [thread:$0]  %s183, 128, %s4, [#allocation10], 64, 64, 4
    $region33: #{tpu_custom_call.1} parent=1 // pred_fallthru
      _
    // Predicated region
    $region34: #{tpu_custom_call.1} parent=1 // pred_check
      _
    $region35: #{tpu_custom_call.1} parent=1 // pred_check_branch
      %190 = sbr.rel (0) target = $region37
    $region36: #{tpu_custom_call.1} parent=1 // pred_region
      %s192 = ssub.s32 128, 128
      %193 = vsyncadd [#allocation10], %s192
      %s194 = sshll.u32 [#allocation11], 4
      %s195 = int_to_ptr.vmem [resolvable:$true] %s194
      %200 = dma.vmem_to_hbm [thread:$0]  %s195, 128, %s5, [#allocation10], 64, 64, 4
    $region37: #{tpu_custom_call.1} parent=1 // pred_fallthru
      _
    // Predicated region
    $region38: #{tpu_custom_call.1} parent=1 // pred_check
      _
    $region39: #{tpu_custom_call.1} parent=1 // pred_check_branch
      %202 = sbr.rel (0) target = $region41
    $region40: #{tpu_custom_call.1} parent=1 // pred_region
      %203 = dma.done [#allocation4], 128
    $region41: #{tpu_custom_call.1} parent=1 // pred_fallthru
      _
    // Predicated region
    $region42: #{tpu_custom_call.1} parent=1 // pred_check
      _
    $region43: #{tpu_custom_call.1} parent=1 // pred_check_branch
      %205 = sbr.rel (0) target = $region45
    $region44: #{tpu_custom_call.1} parent=1 // pred_region
      %206 = dma.done [#allocation10], 128
    $region45: #{tpu_custom_call.1} parent=1 // pred_fallthru
      _
    // Predicated region
    $region46: #{tpu_custom_call.1} parent=1 // pred_check
      _
    $region47: #{tpu_custom_call.1} parent=1 // pred_check_branch
      %208 = sbr.rel (0) target = $region49
    $region48: #{tpu_custom_call.1} parent=1 // pred_region
      %209 = dma.done [#allocation10], 128
    $region49: #{tpu_custom_call.1} parent=1 // pred_fallthru
      _
    %210 = vsyncpa [#allocation3], 1
    %211 = vsyncpa [#allocation6], 1
    %212 = vsyncpa [#allocation4], 1
    %213 = vsyncpa [#allocation10], 1

</llo_original>
